<compile_context>
chip_gen: v5e
topology: v5e:2x2
jax: 0.10.0
libtpu: 0.0.40
codegen_flags: <defaults>
</compile_context>

<pallas_src>
import functools
import math

import jax
import jax.numpy as jnp
from jax import lax
from jax.experimental import pallas as pl
from jax.experimental.pallas import tpu as pltpu

_BN_EPS = 1e-5
_ADAM_LR = 0.01
_ADAM_EPS = 1e-8


def _cca_fused_kernel(scal_ref, x_ref, o_ref, *, B, C, inv_n, s0_val, sum_s0,
                      grad_const):
    """Fused CCA forward.

    scal_ref: (C+4,) SMEM  -> [w_0..w_{C-1}, bn_gamma, bn_beta, prelu_a, detal]
    x_ref:    (B*C, P) VMEM input viewed as rows of pixels
    o_ref:    (B*C, P) VMEM output (HBM buffer aliased with the input)
    """
    x = x_ref[...]                                            # (B*C, P) f32

    # --- 1x1 conv over channels: scalar-weighted sublane adds (pure VPU). ---
    # (The conv bias is mathematically cancelled by the BN mean subtraction.)
    rows = []
    for b in range(B):
        acc = x[b * C:b * C + 1, :] * scal_ref[0]
        for c in range(1, C):
            acc = acc + x[b * C + c:b * C + c + 1, :] * scal_ref[c]
        rows.append(acc)
    y = jnp.concatenate(rows, axis=0)                         # (B, P)

    # --- BatchNorm2d(1), training-mode biased stats (two-pass variance). ----
    mean = jnp.sum(y) * inv_n
    yc = y - mean                                             # stays in vregs
    var = jnp.sum(yc * yc) * inv_n
    gamma = scal_ref[C + 0]
    beta = scal_ref[C + 1]
    yn = yc * lax.rsqrt(var + _BN_EPS) * gamma + beta

    # --- PReLU (single shared parameter). -----------------------------------
    alpha = scal_ref[C + 2]
    m = jnp.where(yn >= 0.0, yn, alpha * yn)                  # map.view(B, P)

    # --- singer_spatial_optimize (Gram matrix reassociated away). -----------
    # Column L2-normalize over the batch dim (no eps: matches torch.norm path;
    # an all-zero column would produce Inf/NaN exactly like the reference).
    col_sq = jnp.sum(m * m, axis=0, keepdims=True)            # (1, P)
    xn = m * lax.rsqrt(col_sq)                                # EUP rsqrt
    # gs = s0 @ (Xn^T Xn - 1) = (s0 @ Xn^T) @ Xn - sum(s0);  s0 is constant.
    row_sum = jnp.sum(xn, axis=1, keepdims=True)              # (B, 1)
    gs = jnp.sum((s0_val * row_sum) * xn, axis=0, keepdims=True) - sum_s0
    # grad of (50*d_loss + f_spa_loss): the d-term is data-independent.
    grad = grad_const - 2.0 * gs                              # (1, P)
    # One Adam step, t=1, zero moments: s_new = s0 - lr * g / (|g| + eps).
    mask = s0_val - _ADAM_LR * grad / (jnp.abs(grad) + _ADAM_EPS)   # (1, P)

    # --- out = x + detal * (mask * x); mask broadcasts over B*C rows. -------
    detal = scal_ref[C + 3]
    o_ref[...] = x + detal * (mask * x)


def cca_forward(x, params):
    """Forward pass of CCA.  x: (B, C, H, W) float32, H == W."""
    B, C, H, W = x.shape
    assert H == W, "singer_spatial_optimize assumes square spatial maps"
    P = H * W
    size = H

    x2d = x.reshape(B * C, P).astype(jnp.float32)

    # All per-layer scalars in ONE tiny SMEM transfer:
    #   [w_0 .. w_{C-1}, bn_gamma, bn_beta, prelu_alpha, detal]
    # (conv bias intentionally not passed: exactly cancelled by BN.)
    scal = jnp.concatenate([
        params["conv_w"].reshape(C).astype(jnp.float32),
        params["bn_gamma"].reshape(1).astype(jnp.float32),
        params["bn_beta"].reshape(1).astype(jnp.float32),
        params["prelu_a"].reshape(1).astype(jnp.float32),
        params["detal"].reshape(1).astype(jnp.float32),
    ])                                                        # (C+4,)

    # Data-independent constants of the 1-step optimizer, folded at trace time.
    s0_val = math.sqrt(float(size * size)) / float(size * size)  # every s0 entry
    sum_s0 = float(P) * s0_val                                   # s0 @ ones(P)
    d = math.sqrt(float(P) * s0_val * s0_val)                    # ||s0|| (== 1)
    coef = (1.0 / (d * (2.0 - d))) if d >= 1.0 else (-1.0 / (d * d))
    grad_const = 50.0 * coef * s0_val                            # 50 * grad(d_loss)
    inv_n = 1.0 / float(B * P)                                   # BN stat scale

    kernel = functools.partial(_cca_fused_kernel, B=B, C=C, inv_n=inv_n,
                               s0_val=s0_val, sum_s0=sum_s0,
                               grad_const=grad_const)

    out2d = pl.pallas_call(
        kernel,
        grid=(1,),
        in_specs=[
            pl.BlockSpec(memory_space=pltpu.MemorySpace.SMEM),   # packed scalars
            pl.BlockSpec((B * C, P), lambda i: (0, 0)),          # x slab
        ],
        out_specs=pl.BlockSpec((B * C, P), lambda i: (0, 0)),
        out_shape=jax.ShapeDtypeStruct((B * C, P), jnp.float32),
        input_output_aliases={1: 0},                             # out aliases x slab
    )(scal, x2d)

    return out2d.reshape(B, C, H, W)


if __name__ == "__main__":
    key = jax.random.PRNGKey(0)
    kx, kw, kb = jax.random.split(key, 3)
    B, C, H, W = 2, 4, 16, 16
    x = jax.random.normal(kx, (B, C, H, W), dtype=jnp.float32)

    # Deterministic parameter init (shapes from CCA.__init__ with ic=C).
    bound = 1.0 / math.sqrt(C)
    params = {
        "conv_w": jax.random.uniform(kw, (1, C, 1, 1), jnp.float32, -bound, bound),
        # Present in the PyTorch module, but a scalar bias before BatchNorm is
        # exactly cancelled by the mean subtraction, so the kernel ignores it.
        "conv_b": jax.random.uniform(kb, (1,), jnp.float32, -bound, bound),
        "bn_gamma": jnp.ones((1,), jnp.float32),
        "bn_beta": jnp.zeros((1,), jnp.float32),
        "prelu_a": jnp.full((1,), 0.25, jnp.float32),   # PReLU default
        "detal": jnp.full((1,), 0.2, jnp.float32),
    }

    out = jax.jit(cca_forward)(x, params)
    jax.block_until_ready(out)
    assert out.shape == (B, C, H, W)
    print("KERNEL_OK")
</pallas_src>

<mosaic_0001>
module attributes {stable_mosaic.version = 11 : i64} {
  func.func @_cca_fused_kernel(%arg0: i32, %arg1: memref<8xf32, #tpu.memory_space<smem>>, %arg2: memref<8x256xf32, #tpu.memory_space<vmem>>, %arg3: memref<8x256xf32, #tpu.memory_space<vmem>>) attributes {dimension_semantics = [#tpu.dimension_semantics<arbitrary>], iteration_bounds = array<i64: 1>, scalar_prefetch = 0 : i64, scratch_operands = 0 : i64, tpu.core_type = #tpu.core_type<tc>, window_params = [{transform_indices = @transform_0, window_bounds = array<i64: 8>}, {pipeline_mode = #tpu.pipeline_mode<synchronous>, transform_indices = @transform_1, window_bounds = array<i64: 8, 256>}, {pipeline_mode = #tpu.pipeline_mode<synchronous>, transform_indices = @transform_2, window_bounds = array<i64: 8, 256>}]} {
    %c0 = arith.constant 0 : index
    %c0_0 = arith.constant 0 : index
    %0 = vector.load %arg2[%c0, %c0_0] : memref<8x256xf32, #tpu.memory_space<vmem>>, vector<8x256xf32>
    %1 = vector.extract_strided_slice %0 {offsets = [0, 0], sizes = [1, 256], strides = [1, 1]} : vector<8x256xf32> to vector<1x256xf32>
    %c0_1 = arith.constant 0 : index
    %2 = memref.load %arg1[%c0_1] : memref<8xf32, #tpu.memory_space<smem>>
    %3 = vector.broadcast %2 : f32 to vector<1x256xf32>
    %4 = arith.mulf %1, %3 : vector<1x256xf32>
    %5 = vector.extract_strided_slice %0 {offsets = [1, 0], sizes = [1, 256], strides = [1, 1]} : vector<8x256xf32> to vector<1x256xf32>
    %c1 = arith.constant 1 : index
    %6 = memref.load %arg1[%c1] : memref<8xf32, #tpu.memory_space<smem>>
    %7 = vector.broadcast %6 : f32 to vector<1x256xf32>
    %8 = arith.mulf %5, %7 : vector<1x256xf32>
    %9 = arith.addf %4, %8 : vector<1x256xf32>
    %10 = vector.extract_strided_slice %0 {offsets = [2, 0], sizes = [1, 256], strides = [1, 1]} : vector<8x256xf32> to vector<1x256xf32>
    %c2 = arith.constant 2 : index
    %11 = memref.load %arg1[%c2] : memref<8xf32, #tpu.memory_space<smem>>
    %12 = vector.broadcast %11 : f32 to vector<1x256xf32>
    %13 = arith.mulf %10, %12 : vector<1x256xf32>
    %14 = arith.addf %9, %13 : vector<1x256xf32>
    %15 = vector.extract_strided_slice %0 {offsets = [3, 0], sizes = [1, 256], strides = [1, 1]} : vector<8x256xf32> to vector<1x256xf32>
    %c3 = arith.constant 3 : index
    %16 = memref.load %arg1[%c3] : memref<8xf32, #tpu.memory_space<smem>>
    %17 = vector.broadcast %16 : f32 to vector<1x256xf32>
    %18 = arith.mulf %15, %17 : vector<1x256xf32>
    %19 = arith.addf %14, %18 : vector<1x256xf32>
    %20 = vector.extract_strided_slice %0 {offsets = [4, 0], sizes = [1, 256], strides = [1, 1]} : vector<8x256xf32> to vector<1x256xf32>
    %c0_2 = arith.constant 0 : index
    %21 = memref.load %arg1[%c0_2] : memref<8xf32, #tpu.memory_space<smem>>
    %22 = vector.broadcast %21 : f32 to vector<1x256xf32>
    %23 = arith.mulf %20, %22 : vector<1x256xf32>
    %24 = vector.extract_strided_slice %0 {offsets = [5, 0], sizes = [1, 256], strides = [1, 1]} : vector<8x256xf32> to vector<1x256xf32>
    %c1_3 = arith.constant 1 : index
    %25 = memref.load %arg1[%c1_3] : memref<8xf32, #tpu.memory_space<smem>>
    %26 = vector.broadcast %25 : f32 to vector<1x256xf32>
    %27 = arith.mulf %24, %26 : vector<1x256xf32>
    %28 = arith.addf %23, %27 : vector<1x256xf32>
    %29 = vector.extract_strided_slice %0 {offsets = [6, 0], sizes = [1, 256], strides = [1, 1]} : vector<8x256xf32> to vector<1x256xf32>
    %c2_4 = arith.constant 2 : index
    %30 = memref.load %arg1[%c2_4] : memref<8xf32, #tpu.memory_space<smem>>
    %31 = vector.broadcast %30 : f32 to vector<1x256xf32>
    %32 = arith.mulf %29, %31 : vector<1x256xf32>
    %33 = arith.addf %28, %32 : vector<1x256xf32>
    %34 = vector.extract_strided_slice %0 {offsets = [7, 0], sizes = [1, 256], strides = [1, 1]} : vector<8x256xf32> to vector<1x256xf32>
    %c3_5 = arith.constant 3 : index
    %35 = memref.load %arg1[%c3_5] : memref<8xf32, #tpu.memory_space<smem>>
    %36 = vector.broadcast %35 : f32 to vector<1x256xf32>
    %37 = arith.mulf %34, %36 : vector<1x256xf32>
    %38 = arith.addf %33, %37 : vector<1x256xf32>
    %39 = tpu.concatenate %19, %38 in 0 : vector<1x256xf32>, vector<1x256xf32> -> vector<2x256xf32>
    %40 = vector.shape_cast %39 : vector<2x256xf32> to vector<1x2x256xf32>
    %cst = arith.constant dense<0.000000e+00> : vector<1xf32>
    %41 = vector.multi_reduction <add>, %40, %cst [1, 2] : vector<1x2x256xf32> to vector<1xf32>
    %42 = vector.shape_cast %41 : vector<1xf32> to vector<1x1x1xf32>
    %43 = vector.extract %42[0, 0, 0] : f32 from vector<1x1x1xf32>
    %cst_6 = arith.constant 0.001953125 : f32
    %44 = arith.mulf %43, %cst_6 : f32
    %45 = vector.broadcast %44 : f32 to vector<2x256xf32>
    %46 = arith.subf %39, %45 : vector<2x256xf32>
    %47 = arith.mulf %46, %46 : vector<2x256xf32>
    %48 = vector.shape_cast %47 : vector<2x256xf32> to vector<1x2x256xf32>
    %cst_7 = arith.constant dense<0.000000e+00> : vector<1xf32>
    %49 = vector.multi_reduction <add>, %48, %cst_7 [1, 2] : vector<1x2x256xf32> to vector<1xf32>
    %50 = vector.shape_cast %49 : vector<1xf32> to vector<1x1x1xf32>
    %51 = vector.extract %50[0, 0, 0] : f32 from vector<1x1x1xf32>
    %cst_8 = arith.constant 0.001953125 : f32
    %52 = arith.mulf %51, %cst_8 : f32
    %c4 = arith.constant 4 : index
    %53 = memref.load %arg1[%c4] : memref<8xf32, #tpu.memory_space<smem>>
    %c5 = arith.constant 5 : index
    %54 = memref.load %arg1[%c5] : memref<8xf32, #tpu.memory_space<smem>>
    %cst_9 = arith.constant 9.99999974E-6 : f32
    %55 = arith.addf %52, %cst_9 : f32
    %56 = math.rsqrt %55 : f32
    %57 = vector.broadcast %56 : f32 to vector<2x256xf32>
    %58 = arith.mulf %46, %57 : vector<2x256xf32>
    %59 = vector.broadcast %53 : f32 to vector<2x256xf32>
    %60 = arith.mulf %58, %59 : vector<2x256xf32>
    %61 = vector.broadcast %54 : f32 to vector<2x256xf32>
    %62 = arith.addf %60, %61 : vector<2x256xf32>
    %c6 = arith.constant 6 : index
    %63 = memref.load %arg1[%c6] : memref<8xf32, #tpu.memory_space<smem>>
    %cst_10 = arith.constant 0.000000e+00 : f32
    %64 = vector.broadcast %cst_10 : f32 to vector<2x256xf32>
    %65 = arith.cmpf oge, %62, %64 : vector<2x256xf32>
    %66 = vector.broadcast %63 : f32 to vector<2x256xf32>
    %67 = arith.mulf %66, %62 : vector<2x256xf32>
    %68 = arith.select %65, %62, %67 : vector<2x256xi1>, vector<2x256xf32>
    %69 = arith.mulf %68, %68 : vector<2x256xf32>
    %cst_11 = arith.constant dense<0.000000e+00> : vector<256xf32>
    %70 = vector.multi_reduction <add>, %69, %cst_11 [0] : vector<2x256xf32> to vector<256xf32>
    %71 = vector.shape_cast %70 : vector<256xf32> to vector<1x256xf32>
    %72 = math.rsqrt %71 : vector<1x256xf32>
    %73 = vector.broadcast %72 : vector<1x256xf32> to vector<2x256xf32>
    %74 = arith.mulf %68, %73 : vector<2x256xf32>
    %cst_12 = arith.constant dense<0.000000e+00> : vector<2xf32>
    %75 = vector.multi_reduction <add>, %74, %cst_12 [1] : vector<2x256xf32> to vector<2xf32>
    %76 = vector.shape_cast %75 : vector<2xf32> to vector<2x1xf32>
    %cst_13 = arith.constant 6.250000e-02 : f32
    %77 = vector.broadcast %cst_13 : f32 to vector<2x1xf32>
    %78 = arith.mulf %77, %76 : vector<2x1xf32>
    %79 = vector.broadcast %78 : vector<2x1xf32> to vector<2x256xf32>
    %80 = arith.mulf %79, %74 : vector<2x256xf32>
    %cst_14 = arith.constant dense<0.000000e+00> : vector<256xf32>
    %81 = vector.multi_reduction <add>, %80, %cst_14 [0] : vector<2x256xf32> to vector<256xf32>
    %82 = vector.shape_cast %81 : vector<256xf32> to vector<1x256xf32>
    %cst_15 = arith.constant 1.600000e+01 : f32
    %83 = vector.broadcast %cst_15 : f32 to vector<1x256xf32>
    %84 = arith.subf %82, %83 : vector<1x256xf32>
    %cst_16 = arith.constant 2.000000e+00 : f32
    %85 = vector.broadcast %cst_16 : f32 to vector<1x256xf32>
    %86 = arith.mulf %85, %84 : vector<1x256xf32>
    %cst_17 = arith.constant 3.125000e+00 : f32
    %87 = vector.broadcast %cst_17 : f32 to vector<1x256xf32>
    %88 = arith.subf %87, %86 : vector<1x256xf32>
    %cst_18 = arith.constant 0.00999999977 : f32
    %89 = vector.broadcast %cst_18 : f32 to vector<1x256xf32>
    %90 = arith.mulf %89, %88 : vector<1x256xf32>
    %91 = math.absf %88 : vector<1x256xf32>
    %cst_19 = arith.constant 9.99999993E-9 : f32
    %92 = vector.broadcast %cst_19 : f32 to vector<1x256xf32>
    %93 = arith.addf %91, %92 : vector<1x256xf32>
    %94 = arith.divf %90, %93 : vector<1x256xf32>
    %cst_20 = arith.constant 6.250000e-02 : f32
    %95 = vector.broadcast %cst_20 : f32 to vector<1x256xf32>
    %96 = arith.subf %95, %94 : vector<1x256xf32>
    %c7 = arith.constant 7 : index
    %97 = memref.load %arg1[%c7] : memref<8xf32, #tpu.memory_space<smem>>
    %98 = vector.broadcast %96 : vector<1x256xf32> to vector<8x256xf32>
    %99 = arith.mulf %98, %0 : vector<8x256xf32>
    %100 = vector.broadcast %97 : f32 to vector<8x256xf32>
    %101 = arith.mulf %100, %99 : vector<8x256xf32>
    %102 = arith.addf %0, %101 : vector<8x256xf32>
    %c0_21 = arith.constant 0 : index
    %c0_22 = arith.constant 0 : index
    %103 = vector.load %arg3[%c0_21, %c0_22] : memref<8x256xf32, #tpu.memory_space<vmem>>, vector<8x256xf32>
    tpu.vector_store %arg3[%c0_21, %c0_22], %102 {strides = array<i32>} : memref<8x256xf32, #tpu.memory_space<vmem>>, vector<8x256xf32>,
    return
  }
  func.func @transform_0(%arg0: i32) -> i32 {
    %c0_i32 = arith.constant 0 : i32
    %c0_i32_0 = arith.constant 0 : i32
    return %c0_i32 : i32
  }
  func.func @transform_1(%arg0: i32) -> (i32, i32) {
    %c0_i32 = arith.constant 0 : i32
    %c0_i32_0 = arith.constant 0 : i32
    %c0_i32_1 = arith.constant 0 : i32
    return %c0_i32, %c0_i32_0 : i32, i32
  }
  func.func @transform_2(%arg0: i32) -> (i32, i32) {
    %c0_i32 = arith.constant 0 : i32
    %c0_i32_0 = arith.constant 0 : i32
    %c0_i32_1 = arith.constant 0 : i32
    return %c0_i32, %c0_i32_0 : i32, i32
  }
}

</mosaic_0001>

<llo_original>
// kernel: cca_forward.1
$region0: #{cca_forward.1}
  #allocation0 [shape = 'u32[]', space=smem, size = 0x4, offset = 0x4, fixed_abs, tag = 'smem constant byte address 0x4 - core index']
  #allocation1 [shape = 'u32[72,128]{1,0:T(1,128)}', space=vmem, size = 0x9000, scoped, tag = 'internal scratch']
  %s0 = inlined_call_operand.vmem [shape: f32[8], index: 0, kind: input, shape index: {}]
  %s1 = inlined_call_operand.vmem [shape: f32[8,256], index: 1, kind: input, shape index: {}, may-alias: {1,2}]
  %s2 = inlined_call_operand.vmem [shape: f32[8,256], index: 2, kind: output, shape index: {}, may-alias: {1,2}]
  %s3 = sld [smem:[#allocation0]]
  $region22: #{cca_forward.1} parent=0
    _
  %s5 = ssub.s32 1, %s3
  %s6 = scalar_select 0, %s5, %s3
  $region1: #{cca_forward.1} parent=0
    #allocation2 [shape = 'u8[512]{0}', space=smem, size = 0x200, scoped, tag = 'input window, operand 0, single buffered']
    #allocation3 [shape = 's32[1]{0}', space=sflag, size = 0x4, scoped, tag = 'scoped memory for cca_forward.1']
    %7 = vsyncpa [#allocation3], 0
    // Predicated region
    $region2: #{cca_forward.1} parent=1 // pred_check
      _
    $region3: #{cca_forward.1} parent=1 // pred_check_branch
      %9 = sbr.rel (0) target = $region5
    $region4: #{cca_forward.1} parent=1 // pred_region
      %11 = vsyncadd [#allocation3], 0
      %s13 = sshll.u32 %s0, 4
      %s14 = int_to_ptr.vmem [resolvable:$true] %s13
      %16 = dma.vmem_to_smem %s14, 16, [#allocation2], [#allocation3]
    $region5: #{cca_forward.1} parent=1 // pred_fallthru
      _
    // Predicated region
    $region6: #{cca_forward.1} parent=1 // pred_check
      _
    $region7: #{cca_forward.1} parent=1 // pred_check_branch
      %18 = sbr.rel (0) target = $region9
    $region8: #{cca_forward.1} parent=1 // pred_region
      _
    $region9: #{cca_forward.1} parent=1 // pred_fallthru
      _
    // Predicated region
    $region10: #{cca_forward.1} parent=1 // pred_check
      _
    $region11: #{cca_forward.1} parent=1 // pred_check_branch
      %20 = sbr.rel (0) target = $region13
    $region12: #{cca_forward.1} parent=1 // pred_region
      %22 = dma.done [#allocation3], 16
    $region13: #{cca_forward.1} parent=1 // pred_fallthru
      _
    %23 = sfence
    %v24 = vld [vmem:[%s1] sm:$0xff]
    %v25 = vld [vmem:[%s1 + $0x8] sm:$0xff]
    %s26 = sld [smem:[#allocation2]]
    %v27 = vstv %s26
    %v28 = vmul.f32 %v24, %v27
    %v29 = vmul.f32 %v25, %v27
    %s30 = sld [smem:[#allocation2 + $0x1]]
    %v31 = vstv %s30
    %v32 = vmul.f32 %v24, %v31
    %v33 = vmul.f32 %v25, %v31
    %v36 = vrot.slane %v32, 1
    %v37 = vrot.slane %v33, 1
    %v40 = vadd.f32 %v28, %v36
    %v41 = vadd.f32 %v29, %v37
    %s42 = sld [smem:[#allocation2 + $0x2]]
    %v43 = vstv %s42
    %v44 = vmul.f32 %v24, %v43
    %v45 = vmul.f32 %v25, %v43
    %v48 = vrot.slane %v44, 2
    %v49 = vrot.slane %v45, 2
    %v52 = vadd.f32 %v40, %v48
    %v53 = vadd.f32 %v41, %v49
    %s54 = sld [smem:[#allocation2 + $0x3]]
    %v55 = vstv %s54
    %v56 = vmul.f32 %v24, %v55
    %v57 = vmul.f32 %v25, %v55
    %v60 = vrot.slane %v56, 3
    %v61 = vrot.slane %v57, 3
    %v64 = vadd.f32 %v52, %v60
    %v65 = vadd.f32 %v53, %v61
    %v68 = vrot.slane %v64, 3
    %v69 = vrot.slane %v65, 3
    %vm72 = vcmask 1040384
    %v73 = vsel %vm72, %v64, %v68
    %v74 = vsel %vm72, %v65, %v69
    %vm75 = vcmask 1041408
    %v76 = vsel %vm75, %v73, 0.0
    %v77 = vsel %vm75, %v74, 0.0
    %v78 = vadd.f32 %v76, %v77
    %79 = vadd.xlane.f32.xlu0 %v78
    %v80 = vpop.xlane.xlu0 %79
    %v81 = vrot.slane %v80, 4
    %v82 = vadd.f32 %v80, %v81
    %v83 = vrot.slane %v82, 2
    %v84 = vadd.f32 %v82, %v83
    %v85 = vrot.slane %v84, 1
    %v86 = vadd.f32 %v84, %v85
    %s87 = vtos %v86
    %s88 = smul.f32 %s87, 0.001953125
    %v89 = vstv %s88
    %v90 = vsub.f32 %v73, %v89
    %v91 = vsub.f32 %v74, %v89
    %v92 = vmul.f32 %v90, %v90
    %v93 = vmul.f32 %v91, %v91
    %v94 = vsel %vm75, %v92, 0.0
    %v95 = vsel %vm75, %v93, 0.0
    %v96 = vadd.f32 %v94, %v95
    %97 = vadd.xlane.f32.xlu0 %v96
    %v98 = vpop.xlane.xlu0 %97
    %v99 = vrot.slane %v98, 4
    %v100 = vadd.f32 %v98, %v99
    %v101 = vrot.slane %v100, 2
    %v102 = vadd.f32 %v100, %v101
    %v103 = vrot.slane %v102, 1
    %v104 = vadd.f32 %v102, %v103
    %s105 = vtos %v104
    %s106 = smul.f32 %s105, 0.001953125
    %s107 = sld [smem:[#allocation2 + $0x4]]
    %s108 = sld [smem:[#allocation2 + $0x5]]
    %s109 = sadd.f32 %s106, 1e-05
    %v110 = vstv %s109
    %v111 = vrsqrt.pop %v110
    %v112 = vmul.f32 %v111, %v110
    %v113 = vmul.f32 %v112, %v111
    %v114 = vmul.f32 0.5, %v113
    %v115 = vsub.f32 1.5, %v114
    %v116 = vmul.f32 %v111, %v115
    %vm117 = vweird.f32 %v110
    %vm118 = vweird.f32 %v111
    %vm119 = vmor %vm117, %vm118
    %v120 = vsel %vm119, %v111, %v116
    %s121 = vtos %v120
    %v122 = vstv %s121
    %v123 = vmul.f32 %v90, %v122
    %v124 = vmul.f32 %v91, %v122
    %v125 = vstv %s107
    %v126 = vmul.f32 %v123, %v125
    %v127 = vmul.f32 %v124, %v125
    %v128 = vstv %s108
    %v129 = vadd.f32 %v126, %v128
    %v130 = vadd.f32 %v127, %v128
    %s131 = sld [smem:[#allocation2 + $0x6]]
    %vm132 = vcmp.ge.f32.partialorder %v129, 0.0
    %vm133 = vcmp.ge.f32.partialorder %v130, 0.0
    %v134 = vstv %s131
    %v135 = vmul.f32 %v134, %v129
    %v136 = vmul.f32 %v134, %v130
    %v137 = vsel %vm132, %v129, %v135
    %v138 = vsel %vm133, %v130, %v136
    %v139 = vmul.f32 %v137, %v137
    %v140 = vmul.f32 %v138, %v138
    %v141 = vsel %vm75, %v139, 0.0
    %v142 = vrot.slane %v141, 4
    %v143 = vadd.f32 %v141, %v142
    %v144 = vrot.slane %v143, 2
    %v145 = vadd.f32 %v143, %v144
    %v146 = vrot.slane %v145, 1
    %v147 = vadd.f32 %v145, %v146
    %v148 = vsel %vm75, %v140, 0.0
    %v149 = vrot.slane %v148, 4
    %v150 = vadd.f32 %v148, %v149
    %v151 = vrot.slane %v150, 2
    %v152 = vadd.f32 %v150, %v151
    %v153 = vrot.slane %v152, 1
    %v154 = vadd.f32 %v152, %v153
    %v155 = vrsqrt.pop %v147
    %v156 = vmul.f32 %v155, %v147
    %v157 = vmul.f32 %v156, %v155
    %v158 = vmul.f32 0.5, %v157
    %v159 = vsub.f32 1.5, %v158
    %v160 = vmul.f32 %v155, %v159
    %vm161 = vweird.f32 %v147
    %vm162 = vweird.f32 %v155
    %vm163 = vmor %vm161, %vm162
    %v164 = vsel %vm163, %v155, %v160
    %v165 = vrsqrt.pop %v154
    %v166 = vmul.f32 %v165, %v154
    %v167 = vmul.f32 %v166, %v165
    %v168 = vmul.f32 0.5, %v167
    %v169 = vsub.f32 1.5, %v168
    %v170 = vmul.f32 %v165, %v169
    %vm171 = vweird.f32 %v154
    %vm172 = vweird.f32 %v165
    %vm173 = vmor %vm171, %vm172
    %v174 = vsel %vm173, %v165, %v170
    %v175 = vmul.f32 %v137, %v164
    %v176 = vmul.f32 %v138, %v174
    %v177 = vsel %vm75, %v175, 0.0
    %v178 = vsel %vm75, %v176, 0.0
    %v179 = vadd.f32 %v177, %v178
    %180 = vadd.xlane.f32.xlu0 %v179
    %v181 = vpop.xlane.xlu0 %180
    %v182 = vmul.f32 %v181, 0.0625
    %v183 = vmul.f32 %v182, %v175
    %v184 = vmul.f32 %v182, %v176
    %v185 = vsel %vm75, %v183, 0.0
    %v186 = vrot.slane %v185, 4
    %v187 = vadd.f32 %v185, %v186
    %v188 = vrot.slane %v187, 2
    %v189 = vadd.f32 %v187, %v188
    %v190 = vrot.slane %v189, 1
    %v191 = vadd.f32 %v189, %v190
    %v192 = vsel %vm75, %v184, 0.0
    %v193 = vrot.slane %v192, 4
    %v194 = vadd.f32 %v192, %v193
    %v195 = vrot.slane %v194, 2
    %v196 = vadd.f32 %v194, %v195
    %v197 = vrot.slane %v196, 1
    %v198 = vadd.f32 %v196, %v197
    %v199 = vsub.f32 %v191, 16.0
    %v200 = vsub.f32 %v198, 16.0
    %v201 = vmul.f32 %v199, 2.0
    %v202 = vmul.f32 %v200, 2.0
    %v203 = vsub.f32 3.125, %v201
    %v204 = vsub.f32 3.125, %v202
    %v205 = vmul.f32 %v203, 0.01
    %v206 = vmul.f32 %v204, 0.01
    %v207 = vand.u32 2147483647, %v203
    %v208 = vand.u32 2147483647, %v204
    %v209 = vadd.f32 %v207, 1e-08
    %v210 = vadd.f32 %v208, 1e-08
    %v211 = vrcp.pop %v209
    %v212 = vmul.f32 %v209, %v211
    %v213 = vsub.f32 1.0, %v212
    %v214 = vmul.f32 %v211, %v213
    %v215 = vadd.f32 %v211, %v214
    %vm216 = vweird.f32 %v209
    %vm217 = vweird.f32 %v211
    %vm218 = vmor %vm216, %vm217
    %v219 = vsel %vm218, %v211, %v215
    %v220 = vand.u32 2147483647, %v209
    %vm221 = vcmp.eq.f32.partialorder %v220, 8.507059e+37
    %v222 = vand.u32 %v209, 2147483648
    %v223 = vor.u32 1.1754944e-38, %v222
    %v224 = vsel %vm221, %v223, %v219
    %v225 = vmul.f32 %v205, %v224
    %v226 = vrcp.pop %v210
    %v227 = vmul.f32 %v210, %v226
    %v228 = vsub.f32 1.0, %v227
    %v229 = vmul.f32 %v226, %v228
    %v230 = vadd.f32 %v226, %v229
    %vm231 = vweird.f32 %v210
    %vm232 = vweird.f32 %v226
    %vm233 = vmor %vm231, %vm232
    %v234 = vsel %vm233, %v226, %v230
    %v235 = vand.u32 2147483647, %v210
    %vm236 = vcmp.eq.f32.partialorder %v235, 8.507059e+37
    %v237 = vand.u32 %v210, 2147483648
    %v238 = vor.u32 1.1754944e-38, %v237
    %v239 = vsel %vm236, %v238, %v234
    %v240 = vmul.f32 %v206, %v239
    %v241 = vsub.f32 0.0625, %v225
    %v242 = vsub.f32 0.0625, %v240
    %s243 = sld [smem:[#allocation2 + $0x7]]
    %v244 = vmul.f32 %v241, %v24
    %v245 = vmul.f32 %v242, %v25
    %v246 = vstv %s243
    %v247 = vmul.f32 %v246, %v244
    %v248 = vmul.f32 %v246, %v245
    %v249 = vadd.f32 %v24, %v247
    %v250 = vadd.f32 %v25, %v248
    %251 = vst [vmem:[%s2] sm:$0xff] %v249
    %252 = vst [vmem:[%s2 + $0x8] sm:$0xff] %v250
    // Predicated region
    $region14: #{cca_forward.1} parent=1 // pred_check
      _
    $region15: #{cca_forward.1} parent=1 // pred_check_branch
      %254 = sbr.rel (0) target = $region17
    $region16: #{cca_forward.1} parent=1 // pred_region
      _
    $region17: #{cca_forward.1} parent=1 // pred_fallthru
      _
    // Predicated region
    $region18: #{cca_forward.1} parent=1 // pred_check
      _
    $region19: #{cca_forward.1} parent=1 // pred_check_branch
      %256 = sbr.rel (0) target = $region21
    $region20: #{cca_forward.1} parent=1 // pred_region
      _
    $region21: #{cca_forward.1} parent=1 // pred_fallthru
      _
    %257 = vsyncpa [#allocation3], 1

</llo_original>
